<compile_context>
chip_gen: v7x
topology: tpu7x:2x2x1
jax: 0.10.0
libtpu: 0.0.40
codegen_flags: <defaults>
</compile_context>

<pallas_src>
import functools
import math

import jax
import jax.numpy as jnp
from jax.experimental import pallas as pl
from jax.experimental.pallas import tpu as pltpu

_LANES = 128
_MAX_BLOCK_ROWS = 2048        # (2048, 128) f32 block = 1 MiB
_MIN_BLOCK_ROWS = 512         # smallest block accepted on the no-pad path


# ---------------------------------------------------------------------------
# Kernel
# ---------------------------------------------------------------------------
def _tree_ssq(x, rows):
  """Sum of squares of a (rows, 128) f32 tile -> one (8, 128) vreg.

  Uses a shallow add tree (8 independent partial chains) so the VPU add chain
  stays off the critical path for large blocks.  Reshapes only regroup whole
  (8, 128) tiles, so no relayout is generated.
  """
  sq = x * x
  r8 = rows // 8
  if r8 % 8 == 0 and r8 >= 64:
    t = sq.reshape(8, r8 // 8, 8, _LANES)
    return jnp.sum(jnp.sum(t, axis=1), axis=0)
  return jnp.sum(sq.reshape(r8, 8, _LANES), axis=0)


def _fused_loss_kernel(pred_ref, tgt_ref, reg_ref, out_ref, *,
                       nblk_mse, mse_rows, reg_rows):
  """Grid axis 0 walks nblk_mse MSE blocks, then nblk_reg regularizer blocks.

  out_ref is a resident (2, 8, 128) accumulator:
    out_ref[0] : sum((pred - tgt)^2)        (MSE numerator)
    out_ref[1] : sum(scaled_reg_data^2)     (= output penalty + weight decay)
  """
  i = pl.program_id(0)

  @pl.when(i == 0)
  def _():
    out_ref[...] = jnp.zeros_like(out_ref)

  @pl.when(i < nblk_mse)
  def _():
    d = pred_ref[...] - tgt_ref[...]
    out_ref[0] += _tree_ssq(d, mse_rows)

  @pl.when(i >= nblk_mse)
  def _():
    out_ref[1] += _tree_ssq(reg_ref[...], reg_rows)


# ---------------------------------------------------------------------------
# Packing helpers (wrapper side, all static Python)
# ---------------------------------------------------------------------------
def _flatten_f32(x):
  return x.astype(jnp.float32).reshape(-1)


def _plan(n):
  """Choose (total_rows, block_rows, n_blocks) for n f32 elements laid out as
  a (total_rows, 128) slab tiled by (block_rows, 128)."""
  rows = max(1, -(-n // _LANES))
  rows = -(-rows // 8) * 8                      # (8,128) tiling granularity
  if rows <= _MAX_BLOCK_ROWS:
    return rows, rows, 1                        # single block, minimal pad
  if rows * _LANES == n:
    # Exact lane/sublane fit: look for a divisor block so no pad copy at all.
    for br in range(_MAX_BLOCK_ROWS, _MIN_BLOCK_ROWS - 1, -8):
      if rows % br == 0:
        return rows, br, rows // br
  total = -(-rows // _MAX_BLOCK_ROWS) * _MAX_BLOCK_ROWS
  return total, _MAX_BLOCK_ROWS, total // _MAX_BLOCK_ROWS


def _pack(pieces, total_rows):
  """Concat 1-D f32 pieces (+ zero tail) into a (total_rows, 128) slab."""
  n = sum(int(p.shape[0]) for p in pieces)
  pad = total_rows * _LANES - n
  if pad:
    pieces = list(pieces) + [jnp.zeros((pad,), jnp.float32)]
  flat = pieces[0] if len(pieces) == 1 else jnp.concatenate(pieces)
  return flat.reshape(total_rows, _LANES)


# ---------------------------------------------------------------------------
# Forward implementation (single pallas_call)
# ---------------------------------------------------------------------------
def _loss_forward(predicted, target, per_feature_output, model_params,
                  num_networks, output_regularization, l2_regularization):
  pred = _flatten_f32(predicted)
  tgt = _flatten_f32(target)
  n_pred = int(pred.shape[0])
  assert int(tgt.shape[0]) == n_pred, "predicted/target size mismatch"

  mse_total, mse_br, nblk_mse = _plan(n_pred)
  pred2d = _pack([pred], mse_total)             # pure reshape when exact fit
  tgt2d = _pack([tgt], mse_total)

  # Merge output-penalty + weight-decay into ONE sum-of-squares segment by
  # pre-scaling each piece with sqrt(its weight).  The scale rides along with
  # the concat that materializes these (small) pieces anyway; in exchange the
  # kernel needs one fewer accumulator, one fewer routing predicate, and one
  # fewer block of zero padding.
  num_feat = max(1, len(per_feature_output))
  reg_pieces = []
  for o in per_feature_output:
    s = math.sqrt(output_regularization / (num_feat * max(1, int(o.size))))
    reg_pieces.append(_flatten_f32(o) * jnp.float32(s))
  wd_scale = math.sqrt(l2_regularization / num_networks)
  for p in model_params:
    reg_pieces.append(_flatten_f32(p) * jnp.float32(wd_scale))
  n_reg = sum(int(p.shape[0]) for p in reg_pieces)
  if n_reg == 0:
    reg_pieces = [jnp.zeros((8 * _LANES,), jnp.float32)]
    n_reg = 8 * _LANES
  reg_total, reg_br, nblk_reg = _plan(n_reg)
  reg2d = _pack(reg_pieces, reg_total)

  kernel = functools.partial(_fused_loss_kernel, nblk_mse=nblk_mse,
                             mse_rows=mse_br, reg_rows=reg_br)
  nsteps = nblk_mse + nblk_reg

  out = pl.pallas_call(
      kernel,
      out_shape=jax.ShapeDtypeStruct((2, 8, _LANES), jnp.float32),
      grid=(nsteps,),
      in_specs=[
          # predicted / target: walked during the MSE phase, clamped (and thus
          # resident, no re-fetch) during the regularizer phase.
          pl.BlockSpec((mse_br, _LANES),
                       lambda i: (jnp.minimum(i, nblk_mse - 1), 0)),
          pl.BlockSpec((mse_br, _LANES),
                       lambda i: (jnp.minimum(i, nblk_mse - 1), 0)),
          # regularizer slab: clamped at block 0 during the MSE phase.
          pl.BlockSpec((reg_br, _LANES),
                       lambda i: (jnp.minimum(
                           jnp.maximum(i - nblk_mse, 0), nblk_reg - 1), 0)),
      ],
      out_specs=pl.BlockSpec((2, 8, _LANES), lambda i: (0, 0, 0)),
      compiler_params=pltpu.CompilerParams(
          dimension_semantics=("arbitrary",),
          vmem_limit_bytes=32 * 1024 * 1024),
  )(pred2d, tgt2d, reg2d)

  # Tiny final cross-lane reduce + combine (fused by XLA into one small op).
  sums = jnp.sum(out, axis=(1, 2))              # (2,)
  return sums[0] / jnp.float32(n_pred) + sums[1]


# ---------------------------------------------------------------------------
# Public entry point with analytic VJP (trainer-usable).
# ---------------------------------------------------------------------------
@functools.partial(jax.custom_vjp, nondiff_argnums=(4, 5, 6))
def loss_function(predicted, target, per_feature_output, model_params,
                  num_networks, output_regularization, l2_regularization):
  """predicted: (N,); target: any shape with N elements;
     per_feature_output: list of per-feature output tensors;
     model_params: list of all model parameter arrays."""
  return _loss_forward(predicted, target, per_feature_output, model_params,
                       num_networks, output_regularization, l2_regularization)


def _loss_fwd(predicted, target, per_feature_output, model_params,
              num_networks, output_regularization, l2_regularization):
  out = _loss_forward(predicted, target, per_feature_output, model_params,
                      num_networks, output_regularization, l2_regularization)
  return out, (predicted, target, per_feature_output, model_params)


def _loss_bwd(num_networks, output_regularization, l2_regularization, res, g):
  predicted, target, per_feature_output, model_params = res
  n = predicted.size
  diff = predicted - target.reshape(-1).astype(predicted.dtype)
  dpred = (g * 2.0 / n) * diff
  dtgt = (-dpred).reshape(target.shape).astype(target.dtype)
  num_feat = max(1, len(per_feature_output))
  dfeat = [(g * 2.0 * output_regularization / (num_feat * o.size)) * o
           for o in per_feature_output]
  dparams = [(g * 2.0 * l2_regularization / num_networks) * p
             for p in model_params]
  return dpred.astype(predicted.dtype), dtgt, dfeat, dparams


loss_function.defvjp(_loss_fwd, _loss_bwd)


# ---------------------------------------------------------------------------
# Pure-JAX reference for verification.
# ---------------------------------------------------------------------------
def _loss_reference(predicted, target, per_feature_output, model_params,
                    num_networks, output_regularization, l2_regularization):
  mse = jnp.mean(jnp.square(predicted - target.reshape(-1)))
  pen = sum(jnp.mean(jnp.square(o)) for o in per_feature_output)
  pen = output_regularization * (pen / len(per_feature_output))
  wd = sum(jnp.sum(jnp.square(p)) for p in model_params)
  wd = l2_regularization * (wd / num_networks)
  return mse + pen + wd


if __name__ == "__main__":
  num_features = 4       # == len(model.FeatureNNs) == num_networks
  hidden = 32
  output_regularization = 0.3
  l2_regularization = 0.1

  def build_inputs(batch, key):
    k = jax.random.split(key, 2 + num_features)
    predicted = jax.random.normal(k[0], (batch,), dtype=jnp.float32)
    target = jax.random.normal(k[1], (batch, 1), dtype=jnp.float32)
    per_feature_output = [
        jax.random.normal(k[2 + f], (batch,), dtype=jnp.float32)
        for f in range(num_features)]
    # Each FeatureNN: (hidden,1) weight, (hidden,) bias, (1,hidden) out weight.
    params = []
    pkey = jax.random.fold_in(key, 1234)
    for f in range(num_features):
      pk = jax.random.split(jax.random.fold_in(pkey, f), 3)
      params.append(0.1 * jax.random.normal(pk[0], (hidden, 1), jnp.float32))
      params.append(0.1 * jax.random.normal(pk[1], (hidden,), jnp.float32))
      params.append(0.1 * jax.random.normal(pk[2], (1, hidden), jnp.float32))
    return predicted, target, per_feature_output, params

  key = jax.random.PRNGKey(0)
  # batch=8 is the small primary case; the larger batches exercise the
  # tree-reduce, multi-block accumulation, and no-pad / padded packing paths.
  for batch in (8, 131072, 300000):
    sub = jax.random.fold_in(key, batch)
    predicted, target, feats, params = build_inputs(batch, sub)
    loss = loss_function(predicted, target, feats, params, num_features,
                         output_regularization, l2_regularization)
    loss = jax.block_until_ready(loss)
    ref = _loss_reference(predicted, target, feats, params, num_features,
                          output_regularization, l2_regularization)
    assert jnp.allclose(loss, ref, rtol=1e-4, atol=1e-5), (batch, loss, ref)
  print("KERNEL_OK")
</pallas_src>

<mosaic_0001>
module attributes {stable_mosaic.version = 11 : i64} {
  func.func @_fused_loss_kernel(%arg0: i32, %arg1: memref<8x128xf32, #tpu.memory_space<vmem>>, %arg2: memref<8x128xf32, #tpu.memory_space<vmem>>, %arg3: memref<8x128xf32, #tpu.memory_space<vmem>>, %arg4: memref<2x8x128xf32, #tpu.memory_space<vmem>>) attributes {dimension_semantics = [#tpu.dimension_semantics<arbitrary>], iteration_bounds = array<i64: 2>, scalar_prefetch = 0 : i64, scratch_operands = 0 : i64, tpu.core_type = #tpu.core_type<tc>, window_params = [{transform_indices = @transform_0, window_bounds = array<i64: 8, 128>}, {transform_indices = @transform_1, window_bounds = array<i64: 8, 128>}, {transform_indices = @transform_2, window_bounds = array<i64: 8, 128>}, {pipeline_mode = #tpu.pipeline_mode<synchronous>, transform_indices = @transform_3, window_bounds = array<i64: 2, 8, 128>}]} {
    %c0_i32 = arith.constant 0 : i32
    %0 = arith.cmpi eq, %arg0, %c0_i32 : i32
    %1 = arith.extui %0 : i1 to i32
    %c0_i32_0 = arith.constant 0 : i32
    %2 = arith.cmpi ne, %1, %c0_i32_0 : i32
    scf.if %2 {
      %cst = arith.constant 0.000000e+00 : f32
      %9 = vector.broadcast %cst : f32 to vector<2x8x128xf32>
      %c0 = arith.constant 0 : index
      %c0_4 = arith.constant 0 : index
      %c0_5 = arith.constant 0 : index
      %10 = vector.load %arg4[%c0, %c0_4, %c0_5] : memref<2x8x128xf32, #tpu.memory_space<vmem>>, vector<2x8x128xf32>
      tpu.vector_store %arg4[%c0, %c0_4, %c0_5], %9 {strides = array<i32>} : memref<2x8x128xf32, #tpu.memory_space<vmem>>, vector<2x8x128xf32>,
    } else {
    }
    %c1_i32 = arith.constant 1 : i32
    %3 = arith.cmpi slt, %arg0, %c1_i32 : i32
    %4 = arith.extui %3 : i1 to i32
    %c0_i32_1 = arith.constant 0 : i32
    %5 = arith.cmpi ne, %4, %c0_i32_1 : i32
    scf.if %5 {
      %c0 = arith.constant 0 : index
      %c0_4 = arith.constant 0 : index
      %9 = vector.load %arg1[%c0, %c0_4] : memref<8x128xf32, #tpu.memory_space<vmem>>, vector<8x128xf32>
      %c0_5 = arith.constant 0 : index
      %c0_6 = arith.constant 0 : index
      %10 = vector.load %arg2[%c0_5, %c0_6] : memref<8x128xf32, #tpu.memory_space<vmem>>, vector<8x128xf32>
      %11 = arith.subf %9, %10 : vector<8x128xf32>
      %c0_7 = arith.constant 0 : index
      %c0_8 = arith.constant 0 : index
      %c0_9 = arith.constant 0 : index
      %12 = vector.load %arg4[%c0_7, %c0_8, %c0_9] : memref<2x8x128xf32, #tpu.memory_space<vmem>>, vector<1x8x128xf32>
      %13 = vector.shape_cast %12 : vector<1x8x128xf32> to vector<8x128xf32>
      %14 = arith.mulf %11, %11 : vector<8x128xf32>
      %15 = vector.shape_cast %14 : vector<8x128xf32> to vector<1x8x128xf32>
      %cst = arith.constant dense<0.000000e+00> : vector<8x128xf32>
      %16 = vector.multi_reduction <add>, %15, %cst [0] : vector<1x8x128xf32> to vector<8x128xf32>
      %17 = arith.addf %13, %16 : vector<8x128xf32>
      %c0_10 = arith.constant 0 : index
      %c0_11 = arith.constant 0 : index
      %c0_12 = arith.constant 0 : index
      %18 = vector.load %arg4[%c0_10, %c0_11, %c0_12] : memref<2x8x128xf32, #tpu.memory_space<vmem>>, vector<1x8x128xf32>
      %19 = vector.shape_cast %18 : vector<1x8x128xf32> to vector<8x128xf32>
      %20 = vector.shape_cast %17 : vector<8x128xf32> to vector<1x8x128xf32>
      tpu.vector_store %arg4[%c0_10, %c0_11, %c0_12], %20 {strides = array<i32>} : memref<2x8x128xf32, #tpu.memory_space<vmem>>, vector<1x8x128xf32>,
    } else {
    }
    %c1_i32_2 = arith.constant 1 : i32
    %6 = arith.cmpi sge, %arg0, %c1_i32_2 : i32
    %7 = arith.extui %6 : i1 to i32
    %c0_i32_3 = arith.constant 0 : i32
    %8 = arith.cmpi ne, %7, %c0_i32_3 : i32
    scf.if %8 {
      %c1 = arith.constant 1 : index
      %c0 = arith.constant 0 : index
      %c0_4 = arith.constant 0 : index
      %9 = vector.load %arg4[%c1, %c0, %c0_4] : memref<2x8x128xf32, #tpu.memory_space<vmem>>, vector<1x8x128xf32>
      %10 = vector.shape_cast %9 : vector<1x8x128xf32> to vector<8x128xf32>
      %c0_5 = arith.constant 0 : index
      %c0_6 = arith.constant 0 : index
      %11 = vector.load %arg3[%c0_5, %c0_6] : memref<8x128xf32, #tpu.memory_space<vmem>>, vector<8x128xf32>
      %12 = arith.mulf %11, %11 : vector<8x128xf32>
      %13 = vector.shape_cast %12 : vector<8x128xf32> to vector<1x8x128xf32>
      %cst = arith.constant dense<0.000000e+00> : vector<8x128xf32>
      %14 = vector.multi_reduction <add>, %13, %cst [0] : vector<1x8x128xf32> to vector<8x128xf32>
      %15 = arith.addf %10, %14 : vector<8x128xf32>
      %c1_7 = arith.constant 1 : index
      %c0_8 = arith.constant 0 : index
      %c0_9 = arith.constant 0 : index
      %16 = vector.load %arg4[%c1_7, %c0_8, %c0_9] : memref<2x8x128xf32, #tpu.memory_space<vmem>>, vector<1x8x128xf32>
      %17 = vector.shape_cast %16 : vector<1x8x128xf32> to vector<8x128xf32>
      %18 = vector.shape_cast %15 : vector<8x128xf32> to vector<1x8x128xf32>
      tpu.vector_store %arg4[%c1_7, %c0_8, %c0_9], %18 {strides = array<i32>} : memref<2x8x128xf32, #tpu.memory_space<vmem>>, vector<1x8x128xf32>,
    } else {
    }
    return
  }
  func.func @transform_0(%arg0: i32) -> (i32, i32) {
    %c0_i32 = arith.constant 0 : i32
    %0 = arith.minsi %arg0, %c0_i32 : i32
    %c0_i32_0 = arith.constant 0 : i32
    %c0_i32_1 = arith.constant 0 : i32
    return %0, %c0_i32_0 : i32, i32
  }
  func.func @transform_1(%arg0: i32) -> (i32, i32) {
    %c0_i32 = arith.constant 0 : i32
    %0 = arith.minsi %arg0, %c0_i32 : i32
    %c0_i32_0 = arith.constant 0 : i32
    %c0_i32_1 = arith.constant 0 : i32
    return %0, %c0_i32_0 : i32, i32
  }
  func.func @transform_2(%arg0: i32) -> (i32, i32) {
    %c1_i32 = arith.constant 1 : i32
    %0 = arith.subi %arg0, %c1_i32 : i32
    %c0_i32 = arith.constant 0 : i32
    %1 = arith.maxsi %0, %c0_i32 : i32
    %c0_i32_0 = arith.constant 0 : i32
    %2 = arith.minsi %1, %c0_i32_0 : i32
    %c0_i32_1 = arith.constant 0 : i32
    %c0_i32_2 = arith.constant 0 : i32
    return %2, %c0_i32_1 : i32, i32
  }
  func.func @transform_3(%arg0: i32) -> (i32, i32, i32) {
    %c0_i32 = arith.constant 0 : i32
    %c0_i32_0 = arith.constant 0 : i32
    %c0_i32_1 = arith.constant 0 : i32
    %c0_i32_2 = arith.constant 0 : i32
    return %c0_i32, %c0_i32_0, %c0_i32_1 : i32, i32, i32
  }
}

</mosaic_0001>

<llo_original>
// kernel: tpu_custom_call.1
$region0: #{tpu_custom_call.1}
  #allocation0 [shape = 'u32[]', space=smem, size = 0x4, offset = 0x4, fixed_abs, tag = 'smem constant byte address 0x4 - core index']
  #allocation1 [shape = 'u32[144,128]{1,0:T(1,128)}', space=vmem, size = 0x12000, scoped, tag = 'internal scratch']
  %s0 = inlined_call_operand.hbm [shape: f32[8,128], index: 0, kind: input, shape index: {}]
  %s1 = inlined_call_operand.hbm [shape: f32[8,128], index: 1, kind: input, shape index: {}]
  %s2 = inlined_call_operand.hbm [shape: f32[8,128], index: 2, kind: input, shape index: {}]
  %s3 = inlined_call_operand.hbm [shape: f32[2,8,128], index: 3, kind: output, shape index: {}]
  %s4 = sld [smem:[#allocation0]]
  $region69: #{tpu_custom_call.1} parent=0
    _
  %s6 = ssub.s32 1, %s4
  %s7 = scalar_select 0, %s6, %s4
  $region1: #{tpu_custom_call.1} parent=0
    #allocation2 [shape = 'u8[8192]{0}', space=vmem, size = 0x2000, scoped, tag = 'input window, operand 0']
    #allocation3 [shape = 's32[2]{0}', space=sflag, size = 0x8, scoped, tag = 'scoped memory for tpu_custom_call.1']
    #allocation4 [shape = 's32[2]{0}', space=sflag, size = 0x8, scoped, tag = 'scoped memory for tpu_custom_call.1']
    #allocation5 [shape = 'u8[8192]{0}', space=vmem, size = 0x2000, scoped, tag = 'input window, operand 1']
    #allocation6 [shape = 's32[2]{0}', space=sflag, size = 0x8, scoped, tag = 'scoped memory for tpu_custom_call.1']
    #allocation7 [shape = 'u8[8192]{0}', space=vmem, size = 0x2000, scoped, tag = 'input window, operand 2']
    #allocation8 [shape = 'u8[8192]{0}', space=vmem, size = 0x2000, scoped, tag = 'output window, operand 0, single buffered']
    %8 = vsyncpa [#allocation3], 0
    %s9 = scalar_lea.sflag [#allocation3], 1
    %10 = vsyncpa %s9, 0
    %11 = vsyncpa [#allocation6], 0
    %s12 = scalar_lea.sflag [#allocation6], 1
    %13 = vsyncpa %s12, 0
    %14 = vsyncpa [#allocation4], 0
    loop: start=0, step=1, limit=4
    $region2: #{tpu_custom_call.1} parent=1 // loop_pre_header
      _
    $region3: #{tpu_custom_call.1} parent=1 // loop_header
      %s16 = sphi 0, %s20
      %p17 = scmp.ge.s32.totalorder %s16, 4
      %s30 = sphi 0, %s32
      %s33 = sphi 0, %s30
      %s34 = sphi 0, %s33
      %s50 = sphi 0, %s34
      %s60 = sphi 0, %s62
      %s63 = sphi 0, %s60
      %s64 = sphi 0, %s63
      %s80 = sphi 0, %s64
      %s96 = sphi 0, %s98
      %s99 = sphi 0, %s96
      %s100 = sphi 0, %s99
      %s116 = sphi 0, %s100
      %s120 = sphi 0, %s120
      %s122 = sphi 0, %s120
      %s123 = sphi 0, %s122
      %s137 = sphi 0, %s123
    $region4: #{tpu_custom_call.1} parent=1 // loop_header_branch
      %19 = sbr.rel (%p17) target = $region8
    $region5: #{tpu_custom_call.1} parent=1 // loop_body
      %s21 = ssub.s32 %s16, 1
      %s22 = ssub.s32 %s16, 2
      %s23 = sadd.s32 %s16, 1
      %p24 = scmp.lt.s32.totalorder %s16, 0
      %s25 = scalar_select %p24, %s16, 0
      %p26 = scmp.lt.s32.totalorder %s23, 0
      %s27 = scalar_select %p26, %s23, 0
      %s28 = ssub.s32 %s25, %s27
      %p29 = scmp.eq.s32.totalorder %s28, 0
      %s31 = sadd.s32 %s30, 1
      %s32 = scalar_select %p29, %s30, %s31
      %p35 = pneg %p29
      %p36 = scmp.eq.s32.totalorder %s16, 1
      %p37 = por %p35, %p36
      %p38 = scmp.ne.s32.totalorder %s30, %s33
      %p39 = scmp.eq.s32.totalorder %s16, 0
      %p40 = por %p38, %p39
      %p41 = scmp.ne.s32.totalorder %s30, %s33
      %p42 = scmp.eq.s32.totalorder %s21, 1
      %p43 = por %p41, %p42
      %p44 = scmp.ne.s32.totalorder %s33, %s34
      %p45 = scmp.eq.s32.totalorder %s21, 0
      %p46 = por %p44, %p45
      %p47 = scmp.ne.s32.totalorder %s33, %s34
      %p48 = scmp.eq.s32.totalorder %s22, 1
      %p49 = por %p47, %p48
      %p51 = scmp.ne.s32.totalorder %s34, %s50
      %p52 = scmp.eq.s32.totalorder %s22, 0
      %p53 = por %p51, %p52
      %p54 = scmp.lt.s32.totalorder %s16, 0
      %s55 = scalar_select %p54, %s16, 0
      %p56 = scmp.lt.s32.totalorder %s23, 0
      %s57 = scalar_select %p56, %s23, 0
      %s58 = ssub.s32 %s55, %s57
      %p59 = scmp.eq.s32.totalorder %s58, 0
      %s61 = sadd.s32 %s60, 1
      %s62 = scalar_select %p59, %s60, %s61
      %p65 = pneg %p59
      %p66 = scmp.eq.s32.totalorder %s16, 1
      %p67 = por %p65, %p66
      %p68 = scmp.ne.s32.totalorder %s60, %s63
      %p69 = scmp.eq.s32.totalorder %s16, 0
      %p70 = por %p68, %p69
      %p71 = scmp.ne.s32.totalorder %s60, %s63
      %p72 = scmp.eq.s32.totalorder %s21, 1
      %p73 = por %p71, %p72
      %p74 = scmp.ne.s32.totalorder %s63, %s64
      %p75 = scmp.eq.s32.totalorder %s21, 0
      %p76 = por %p74, %p75
      %p77 = scmp.ne.s32.totalorder %s63, %s64
      %p78 = scmp.eq.s32.totalorder %s22, 1
      %p79 = por %p77, %p78
      %p81 = scmp.ne.s32.totalorder %s64, %s80
      %p82 = scmp.eq.s32.totalorder %s22, 0
      %p83 = por %p81, %p82
      %s84 = ssub.s32 %s16, 1
      %p85 = scmp.gt.s32.totalorder %s84, 0
      %s86 = scalar_select %p85, %s84, 0
      %p87 = scmp.lt.s32.totalorder %s86, 0
      %s88 = scalar_select %p87, %s86, 0
      %s89 = ssub.s32 %s23, 1
      %p90 = scmp.gt.s32.totalorder %s89, 0
      %s91 = scalar_select %p90, %s89, 0
      %p92 = scmp.lt.s32.totalorder %s91, 0
      %s93 = scalar_select %p92, %s91, 0
      %s94 = ssub.s32 %s88, %s93
      %p95 = scmp.eq.s32.totalorder %s94, 0
      %s97 = sadd.s32 %s96, 1
      %s98 = scalar_select %p95, %s96, %s97
      %p101 = pneg %p95
      %p102 = scmp.eq.s32.totalorder %s16, 1
      %p103 = por %p101, %p102
      %p104 = scmp.ne.s32.totalorder %s96, %s99
      %p105 = scmp.eq.s32.totalorder %s16, 0
      %p106 = por %p104, %p105
      %p107 = scmp.ne.s32.totalorder %s96, %s99
      %p108 = scmp.eq.s32.totalorder %s21, 1
      %p109 = por %p107, %p108
      %p110 = scmp.ne.s32.totalorder %s99, %s100
      %p111 = scmp.eq.s32.totalorder %s21, 0
      %p112 = por %p110, %p111
      %p113 = scmp.ne.s32.totalorder %s99, %s100
      %p114 = scmp.eq.s32.totalorder %s22, 1
      %p115 = por %p113, %p114
      %p117 = scmp.ne.s32.totalorder %s100, %s116
      %p118 = scmp.eq.s32.totalorder %s22, 0
      %p119 = por %p117, %p118
      %s121 = sadd.s32 %s120, 1
      %p124 = scmp.eq.s32.totalorder %s16, 1
      %p125 = scmp.ne.s32.totalorder %s120, %s122
      %p126 = scmp.eq.s32.totalorder %s16, 0
      %p127 = por %p125, %p126
      %p128 = scmp.ne.s32.totalorder %s120, %s122
      %p129 = scmp.eq.s32.totalorder %s21, 1
      %p130 = por %p128, %p129
      %p131 = scmp.ne.s32.totalorder %s122, %s123
      %p132 = scmp.eq.s32.totalorder %s21, 0
      %p133 = por %p131, %p132
      %p134 = scmp.ne.s32.totalorder %s122, %s123
      %p135 = scmp.eq.s32.totalorder %s22, 1
      %p136 = por %p134, %p135
      %p138 = scmp.ne.s32.totalorder %s123, %s137
      %p139 = scmp.eq.s32.totalorder %s22, 0
      %p140 = por %p138, %p139
      %p141 = scmp.le.s32.totalorder 1, %s16
      %p142 = scmp.lt.s32.totalorder %s16, 3
      %p143 = pnand %p141, %p142
      %p144 = pneg %p143
      // Predicated region
      $region9: #{tpu_custom_call.1} parent=5 // pred_check
        _
      $region10: #{tpu_custom_call.1} parent=5 // pred_check_branch
        %146 = sbr.rel (%p143) target = $region12
      $region11: #{tpu_custom_call.1} parent=5 // pred_region
        %s147 = ssub.s32 %s16, 1
      $region12: #{tpu_custom_call.1} parent=5 // pred_fallthru
        _
      %p148 = scmp.lt.s32.totalorder %s16, 2
      // Predicated region
      $region13: #{tpu_custom_call.1} parent=5 // pred_check
        %p149 = pneg %p148
      $region14: #{tpu_custom_call.1} parent=5 // pred_check_branch
        %151 = sbr.rel (%p149) target = $region16
      $region15: #{tpu_custom_call.1} parent=5 // pred_region
        // Predicated region
        $region17: #{tpu_custom_call.1} parent=15 // pred_check
          %p152 = pneg %p40
        $region18: #{tpu_custom_call.1} parent=15 // pred_check_branch
          %154 = sbr.rel (%p152) target = $region20
        $region19: #{tpu_custom_call.1} parent=15 // pred_region
          %s155 = sand.u32 %s30, 1
          %s156 = scalar_lea.sflag [#allocation3], %s155
          %s157 = sand.u32 %s30, 1
          %s158 = smul.addr %s157, 8
          %s159 = scalar_lea.vmem [#allocation2], %s158
          %p160 = scmp.lt.s32.totalorder %s16, 0
          %s161 = scalar_select %p160, %s16, 0
          %s163 = ssub.s32 128, 128
          %164 = vsyncadd %s156, %s163
          %s165 = smul.addr %s161, 128
          %s166 = scalar_lea.hbm %s0, %s165
          %s168 = sshll.u32 %s159, 4
          %s169 = int_to_ptr.vmem [resolvable:$true] %s168
          %171 = dma.hbm_to_vmem [thread:$0]  %s166, 128, %s169, %s156
        $region20: #{tpu_custom_call.1} parent=15 // pred_fallthru
          _
        // Predicated region
        $region21: #{tpu_custom_call.1} parent=15 // pred_check
          %p172 = pneg %p70
        $region22: #{tpu_custom_call.1} parent=15 // pred_check_branch
          %174 = sbr.rel (%p172) target = $region24
        $region23: #{tpu_custom_call.1} parent=15 // pred_region
          %s175 = sand.u32 %s16, 1
          %s176 = scalar_lea.sflag [#allocation6], %s175
          %s177 = sand.u32 %s60, 1
          %s178 = smul.addr %s177, 8
          %s179 = scalar_lea.vmem [#allocation5], %s178
          %p180 = scmp.lt.s32.totalorder %s16, 0
          %s181 = scalar_select %p180, %s16, 0
          %s183 = ssub.s32 128, 128
          %184 = vsyncadd %s176, %s183
          %s185 = smul.addr %s181, 128
          %s186 = scalar_lea.hbm %s1, %s185
          %s188 = sshll.u32 %s179, 4
          %s189 = int_to_ptr.vmem [resolvable:$true] %s188
          %191 = dma.hbm_to_vmem [thread:$0]  %s186, 128, %s189, %s176
        $region24: #{tpu_custom_call.1} parent=15 // pred_fallthru
          _
        // Predicated region
        $region25: #{tpu_custom_call.1} parent=15 // pred_check
          %p192 = pneg %p106
        $region26: #{tpu_custom_call.1} parent=15 // pred_check_branch
          %194 = sbr.rel (%p192) target = $region28
        $region27: #{tpu_custom_call.1} parent=15 // pred_region
          %s195 = sand.u32 %s16, 1
          %s196 = scalar_lea.sflag [#allocation6], %s195
          %s197 = sand.u32 %s96, 1
          %s198 = smul.addr %s197, 8
          %s199 = scalar_lea.vmem [#allocation7], %s198
          %s200 = ssub.s32 %s16, 1
          %p201 = scmp.gt.s32.totalorder %s200, 0
          %s202 = scalar_select %p201, %s200, 0
          %p203 = scmp.lt.s32.totalorder %s202, 0
          %s204 = scalar_select %p203, %s202, 0
          %s206 = ssub.s32 128, 128
          %207 = vsyncadd %s196, %s206
          %s208 = smul.addr %s204, 128
          %s209 = scalar_lea.hbm %s2, %s208
          %s211 = sshll.u32 %s199, 4
          %s212 = int_to_ptr.vmem [resolvable:$true] %s211
          %214 = dma.hbm_to_vmem [thread:$0]  %s209, 128, %s212, %s196
        $region28: #{tpu_custom_call.1} parent=15 // pred_fallthru
          _
      $region16: #{tpu_custom_call.1} parent=5 // pred_fallthru
        _
      %p215 = scmp.le.s32.totalorder 1, %s16
      %p216 = scmp.lt.s32.totalorder %s16, 3
      %p217 = pnand %p215, %p216
      %p218 = pneg %p217
      // Predicated region
      $region29: #{tpu_custom_call.1} parent=5 // pred_check
        _
      $region30: #{tpu_custom_call.1} parent=5 // pred_check_branch
        %220 = sbr.rel (%p217) target = $region32
      $region31: #{tpu_custom_call.1} parent=5 // pred_region
        %s221 = ssub.s32 %s16, 1
        %s222 = sand.u32 %s33, 1
        %s223 = scalar_lea.sflag [#allocation3], %s222
        %s224 = sand.u32 %s33, 1
        %s225 = smul.addr %s224, 8
        %s226 = scalar_lea.vmem [#allocation2], %s225
        // Predicated region
        $region33: #{tpu_custom_call.1} parent=31 // pred_check
          %p227 = pneg %p46
        $region34: #{tpu_custom_call.1} parent=31 // pred_check_branch
          %229 = sbr.rel (%p227) target = $region36
        $region35: #{tpu_custom_call.1} parent=31 // pred_region
          %230 = dma.done %s223, 128
        $region36: #{tpu_custom_call.1} parent=31 // pred_fallthru
          _
        %s231 = sand.u32 %s21, 1
        %s232 = scalar_lea.sflag [#allocation6], %s231
        %s233 = sand.u32 %s63, 1
        %s234 = smul.addr %s233, 8
        %s235 = scalar_lea.vmem [#allocation5], %s234
        // Predicated region
        $region37: #{tpu_custom_call.1} parent=31 // pred_check
          %p236 = pneg %p76
        $region38: #{tpu_custom_call.1} parent=31 // pred_check_branch
          %238 = sbr.rel (%p236) target = $region40
        $region39: #{tpu_custom_call.1} parent=31 // pred_region
          %239 = dma.done %s232, 128
        $region40: #{tpu_custom_call.1} parent=31 // pred_fallthru
          _
        %s240 = sand.u32 %s21, 1
        %s241 = scalar_lea.sflag [#allocation6], %s240
        %s242 = sand.u32 %s99, 1
        %s243 = smul.addr %s242, 8
        %s244 = scalar_lea.vmem [#allocation7], %s243
        // Predicated region
        $region41: #{tpu_custom_call.1} parent=31 // pred_check
          %p245 = pneg %p112
        $region42: #{tpu_custom_call.1} parent=31 // pred_check_branch
          %247 = sbr.rel (%p245) target = $region44
        $region43: #{tpu_custom_call.1} parent=31 // pred_region
          %248 = dma.done %s241, 128
        $region44: #{tpu_custom_call.1} parent=31 // pred_fallthru
          _
        %s249 = sand.u32 %s33, 1
        %s250 = scalar_lea.sflag [#allocation3], %s249
        %s251 = sand.u32 %s33, 1
        %s252 = smul.addr %s251, 8
        %s253 = scalar_lea.vmem [#allocation2], %s252
        %p254 = pneg %p46
        %p255 = pneg %p43
        %s256 = sand.u32 %s21, 1
        %s257 = scalar_lea.sflag [#allocation6], %s256
        %s258 = sand.u32 %s63, 1
        %s259 = smul.addr %s258, 8
        %s260 = scalar_lea.vmem [#allocation5], %s259
        %p261 = pneg %p76
        %p262 = pneg %p73
        %s263 = sand.u32 %s21, 1
        %s264 = scalar_lea.sflag [#allocation6], %s263
        %s265 = sand.u32 %s99, 1
        %s266 = smul.addr %s265, 8
        %s267 = scalar_lea.vmem [#allocation7], %s266
        %p268 = pneg %p112
        %p269 = pneg %p109
        %p270 = pneg %p133
        %p271 = pneg %p130
        %p272 = scmp.lt.s32.totalorder %s21, 0
        %s273 = scalar_select %p272, %s21, 0
        %p274 = scmp.lt.s32.totalorder %s21, 0
        %s275 = scalar_select %p274, %s21, 0
        %s276 = ssub.s32 %s21, 1
        %p277 = scmp.gt.s32.totalorder %s276, 0
        %s278 = scalar_select %p277, %s276, 0
        %p279 = scmp.lt.s32.totalorder %s278, 0
        %s280 = scalar_select %p279, %s278, 0
        %p281 = scmp.eq.s32.totalorder %s21, 0
        // Predicated region
        $region45: #{tpu_custom_call.1} parent=31 // pred_check
          %p282 = pneg %p281
        $region46: #{tpu_custom_call.1} parent=31 // pred_check_branch
          %284 = sbr.rel (%p282) target = $region48
        $region47: #{tpu_custom_call.1} parent=31 // pred_region
          %285 = vst [vmem:[#allocation8] sm:$0xff] 0.0
          %286 = vst [vmem:[#allocation8 + $0x8] sm:$0xff] 0.0
        $region48: #{tpu_custom_call.1} parent=31 // pred_fallthru
          _
        %p287 = scmp.lt.s32.totalorder %s21, 1
        // Predicated region
        $region49: #{tpu_custom_call.1} parent=31 // pred_check
          %p288 = pneg %p287
        $region50: #{tpu_custom_call.1} parent=31 // pred_check_branch
          %290 = sbr.rel (%p288) target = $region52
        $region51: #{tpu_custom_call.1} parent=31 // pred_region
          %v291 = vld [vmem:[%s226] sm:$0xff]
          %v292 = vld [vmem:[%s235] sm:$0xff]
          %v293 = vsub.f32 %v291, %v292
          %v294 = vld [vmem:[#allocation8] sm:$0xff]
          %v295 = vmul.f32 %v293, %v293
          %v296 = vadd.f32 %v295, 0.0
          %v297 = vadd.f32 %v294, %v296
          %298 = vst [vmem:[#allocation8] sm:$0xff] %v297
        $region52: #{tpu_custom_call.1} parent=31 // pred_fallthru
          _
        %p299 = scmp.ge.s32.totalorder %s21, 1
        // Predicated region
        $region53: #{tpu_custom_call.1} parent=31 // pred_check
          %p300 = pneg %p299
        $region54: #{tpu_custom_call.1} parent=31 // pred_check_branch
          %302 = sbr.rel (%p300) target = $region56
        $region55: #{tpu_custom_call.1} parent=31 // pred_region
          %s303 = scalar_lea.vmem [#allocation8], 8
          %v304 = vld [vmem:[%s303] sm:$0xff]
          %v305 = vld [vmem:[%s244] sm:$0xff]
          %v306 = vmul.f32 %v305, %v305
          %v307 = vadd.f32 %v306, 0.0
          %v308 = vadd.f32 %v304, %v307
          %309 = vst [vmem:[%s303] sm:$0xff] %v308
        $region56: #{tpu_custom_call.1} parent=31 // pred_fallthru
          _
        // Predicated region
        $region57: #{tpu_custom_call.1} parent=31 // pred_check
          %p310 = pneg %p130
        $region58: #{tpu_custom_call.1} parent=31 // pred_check_branch
          %312 = sbr.rel (%p310) target = $region60
        $region59: #{tpu_custom_call.1} parent=31 // pred_region
          %s314 = ssub.s32 256, 256
          %315 = vsyncadd [#allocation4], %s314
          %s316 = sshll.u32 [#allocation8], 4
          %s317 = int_to_ptr.vmem [resolvable:$true] %s316
          %322 = dma.vmem_to_hbm [thread:$0]  %s317, 256, %s3, [#allocation4], 128, 128, 8
        $region60: #{tpu_custom_call.1} parent=31 // pred_fallthru
          _
        // Predicated region
        $region61: #{tpu_custom_call.1} parent=31 // pred_check
          %p323 = pneg %p130
        $region62: #{tpu_custom_call.1} parent=31 // pred_check_branch
          %325 = sbr.rel (%p323) target = $region64
        $region63: #{tpu_custom_call.1} parent=31 // pred_region
          %326 = dma.done [#allocation4], 256
        $region64: #{tpu_custom_call.1} parent=31 // pred_fallthru
          _
      $region32: #{tpu_custom_call.1} parent=5 // pred_fallthru
        _
      %p327 = scmp.le.s32.totalorder 2, %s16
      // Predicated region
      $region65: #{tpu_custom_call.1} parent=5 // pred_check
        %p328 = pneg %p327
      $region66: #{tpu_custom_call.1} parent=5 // pred_check_branch
        %330 = sbr.rel (%p328) target = $region68
      $region67: #{tpu_custom_call.1} parent=5 // pred_region
        %s331 = ssub.s32 %s16, 2
      $region68: #{tpu_custom_call.1} parent=5 // pred_fallthru
        _
    $region6: #{tpu_custom_call.1} parent=1 // loop_footer
      %s20 = sadd.s32 1, %s16
    $region7: #{tpu_custom_call.1} parent=1 // loop_footer_branch
      %15 = sbr.rel target = $region3
    $region8: #{tpu_custom_call.1} parent=1 // loop_exit
      _
    %332 = vsyncpa [#allocation3], 1
    %s333 = scalar_lea.sflag [#allocation3], 1
    %334 = vsyncpa %s333, 1
    %335 = vsyncpa [#allocation6], 1
    %s336 = scalar_lea.sflag [#allocation6], 1
    %337 = vsyncpa %s336, 1
    %338 = vsyncpa [#allocation4], 1
    %s339 = scalar_lea.sflag [#allocation4], 1
    %340 = vsyncpa %s339, 1

</llo_original>
